<compile_context>
chip_gen: v7x
topology: tpu7x:2x2x1
jax: 0.10.0
libtpu: 0.0.40
codegen_flags: <defaults>
</compile_context>

<pallas_src>
import functools

import jax
import jax.numpy as jnp
from jax.experimental import pallas as pl
from jax.experimental.pallas import tpu as pltpu


# --------------------------------------------------------------------------
# Row-wise L2 normalization (used once, for xj -> u2).
# --------------------------------------------------------------------------
def _l2_normalize_kernel(x_ref, o_ref):
    x = x_ref[...]
    n = jnp.sqrt(jnp.sum(x * x, axis=1, keepdims=True))
    o_ref[...] = x / jnp.maximum(n, 1e-12)          # == F.normalize(x, dim=1)


def l2_normalize_rows(x, *, tile_rows=None):
    b, d = x.shape
    if tile_rows is None:
        tile_rows = b if b <= 1024 else 1024
    if tile_rows != b:
        assert b % tile_rows == 0 and tile_rows % 8 == 0
    return pl.pallas_call(
        _l2_normalize_kernel,
        out_shape=jax.ShapeDtypeStruct((b, d), jnp.float32),
        grid=(b // tile_rows,),
        in_specs=[pl.BlockSpec((tile_rows, d), lambda i: (i, 0))],
        out_specs=pl.BlockSpec((tile_rows, d), lambda i: (i, 0)),
        compiler_params=pltpu.CompilerParams(
            dimension_semantics=("parallel",)),
    )(x)


# --------------------------------------------------------------------------
# Main contrastive-loss kernel: row-parallel x column-reduction grid.
# --------------------------------------------------------------------------
def _contrastive_loss_kernel(xi_ref, u2pos_ref, u2col_ref, out_ref,
                             u1_ref, pos_ref, denom_ref, *, tau, bf16_matmul):
    j = pl.program_id(1)
    inv_tau = 1.0 / tau

    @pl.when(j == 0)
    def _init():
        # Normalize this xi row-tile once per row tile (not per column step).
        xi = xi_ref[...]
        n1 = jnp.sqrt(jnp.sum(xi * xi, axis=1, keepdims=True))
        u1 = xi / jnp.maximum(n1, 1e-12)            # F.normalize(xi, dim=1)
        u1_ref[...] = u1
        # Positive (row-matched) term, pre-scaled by 1/tau.
        pos_ref[...] = jnp.sum(u1 * u2pos_ref[...], axis=1,
                               keepdims=True) * inv_tau
        denom_ref[...] = jnp.zeros_like(denom_ref)

    u1 = u1_ref[...]
    u2c = u2col_ref[...]
    if bf16_matmul:
        u1 = u1.astype(jnp.bfloat16)
        u2c = u2c.astype(jnp.bfloat16)

    # [tile_b, tile_n] similarity block; contract on the feature axis of both
    # operands (no explicit transpose materialized), f32 accumulation.
    sim = jax.lax.dot_general(
        u1, u2c, (((1,), (1,)), ((), ())),
        preferred_element_type=jnp.float32) * inv_tau
    denom_ref[...] += jnp.sum(jnp.exp(sim), axis=1, keepdims=True)

    @pl.when(j == pl.num_programs(1) - 1)
    def _finalize():
        # -sum(log(exp(pos)/denom)) == sum(log(denom) - pos) over this row tile
        contrib = jnp.log(denom_ref[...]) - pos_ref[...]          # [tile_b, 1]
        out_ref[...] = jnp.broadcast_to(jnp.sum(contrib), out_ref.shape)


def contrastive_loss_forward(xi, xj, *, tau=0.4, tile_b=None, tile_n=None,
                             bf16_matmul=False):
    """Pallas implementation of contrastive_loss.forward.

    xi, xj: [B, D] f32 embeddings.  Returns scalar f32 loss.
    """
    b, d = xi.shape
    assert xj.shape == (b, d), "xi and xj must have the same shape"
    xi = xi.astype(jnp.float32)
    xj = xj.astype(jnp.float32)

    if tile_b is None:
        tile_b = b if b <= 256 else 256       # row tile (MXU M dimension)
    if tile_n is None:
        tile_n = b if b <= 1024 else 1024     # column tile over u2 rows
    assert b % tile_b == 0 and b % tile_n == 0, "batch must divide tile sizes"
    assert tile_b == b or tile_b % 8 == 0
    assert tile_n == b or tile_n % 8 == 0

    # xj normalized exactly once, outside the main kernel (perf review #1/#9).
    u2 = l2_normalize_rows(xj)

    n_row, n_col = b // tile_b, b // tile_n

    # Explicit VMEM budget: double-buffered input tiles + scratches + sim/exp
    # temporaries, with margin; clamped to a cross-generation-safe 64 MiB.
    vmem_floats = (2 * tile_b * d          # xi tile       (2 buffers)
                   + 2 * tile_b * d        # matched u2    (2 buffers)
                   + 2 * tile_n * d        # u2 column tile(2 buffers)
                   + tile_b * d            # u1 scratch
                   + 2 * tile_b * 128      # pos / denom scratch (lane-padded)
                   + 2 * 8 * 128           # partial-loss output (2 buffers)
                   + 3 * tile_b * tile_n)  # sim / exp temporaries
    vmem_limit = min(max(4 * vmem_floats + (4 << 20), 8 << 20), 64 << 20)

    kernel = functools.partial(_contrastive_loss_kernel, tau=tau,
                               bf16_matmul=bf16_matmul)

    partials = pl.pallas_call(
        kernel,
        out_shape=jax.ShapeDtypeStruct((n_row, 8, 128), jnp.float32),
        grid_spec=pltpu.PrefetchScalarGridSpec(
            num_scalar_prefetch=0,
            grid=(n_row, n_col),            # reduction (column) axis last
            in_specs=[
                pl.BlockSpec((tile_b, d), lambda i, j: (i, 0)),  # xi row tile
                pl.BlockSpec((tile_b, d), lambda i, j: (i, 0)),  # matched u2 rows
                pl.BlockSpec((tile_n, d), lambda i, j: (j, 0)),  # u2 column tile
            ],
            # per-row-tile partial loss, (8,128)-aligned, written once at the
            # last column step; stays resident across the reduction axis.
            out_specs=pl.BlockSpec((1, 8, 128), lambda i, j: (i, 0, 0)),
            scratch_shapes=[
                pltpu.VMEM((tile_b, d), jnp.float32),   # normalized xi tile
                pltpu.VMEM((tile_b, 1), jnp.float32),   # positive term / tau
                pltpu.VMEM((tile_b, 1), jnp.float32),   # running denominator
            ],
        ),
        compiler_params=pltpu.CompilerParams(
            dimension_semantics=("parallel", "arbitrary"),
            vmem_limit_bytes=vmem_limit,
        ),
    )(xi, u2, u2)

    return jnp.sum(partials[:, 0, 0])


# --------------------------------------------------------------------------
# Pure-JAX reference (direct transcription of the torch forward).
# --------------------------------------------------------------------------
def reference_contrastive_loss(xi, xj, tau=0.4):
    def normalize(x):
        n = jnp.sqrt(jnp.sum(x * x, axis=1, keepdims=True))
        return x / jnp.maximum(n, 1e-12)

    u1 = normalize(xi)
    u2 = normalize(xj)
    v1 = jnp.sum(u1 * u2, axis=1)
    v2 = u1 @ u2.T
    v1 = jnp.exp(v1 / tau)
    v2 = jnp.sum(jnp.exp(v2 / tau), axis=1)
    return -jnp.sum(jnp.log(v1 / v2))


if __name__ == "__main__":
    # Small shapes consistent with the module: B user embeddings of dim D.
    B, D = 128, 64
    TAU = 0.4

    key = jax.random.PRNGKey(0)
    k_i, k_j = jax.random.split(key)
    xi = jax.random.normal(k_i, (B, D), dtype=jnp.float32)
    xj = jax.random.normal(k_j, (B, D), dtype=jnp.float32)

    ref = reference_contrastive_loss(xi, xj, tau=TAU)

    # Single-block path (grid=(1,1)) -- default for toy shapes.
    out_single = jax.block_until_ready(contrastive_loss_forward(xi, xj, tau=TAU))
    # Tiled path (grid=(4,2)) -- exercises the parallel row axis, the online
    # denominator accumulator across column steps, and partial-loss outputs.
    out_tiled = jax.block_until_ready(
        contrastive_loss_forward(xi, xj, tau=TAU, tile_b=32, tile_n=64))

    assert out_single.shape == ()
    assert jnp.allclose(out_single, ref, rtol=1e-4, atol=1e-3), (
        f"single-block mismatch: {out_single} vs {ref}")
    assert jnp.allclose(out_tiled, ref, rtol=1e-4, atol=1e-3), (
        f"tiled mismatch: {out_tiled} vs {ref}")

    print("KERNEL_OK")
</pallas_src>

<mosaic_0001>
module attributes {stable_mosaic.version = 11 : i64} {
  func.func @_l2_normalize_kernel(%arg0: i32, %arg1: memref<128x64xf32, #tpu.memory_space<vmem>>, %arg2: memref<128x64xf32, #tpu.memory_space<vmem>>) attributes {dimension_semantics = [#tpu.dimension_semantics<parallel>], iteration_bounds = array<i64: 1>, scalar_prefetch = 0 : i64, scratch_operands = 0 : i64, tpu.core_type = #tpu.core_type<tc>, window_params = [{transform_indices = @transform_0, window_bounds = array<i64: 128, 64>}, {transform_indices = @transform_1, window_bounds = array<i64: 128, 64>}]} {
    %c0 = arith.constant 0 : index
    %c0_0 = arith.constant 0 : index
    %0 = vector.load %arg1[%c0, %c0_0] : memref<128x64xf32, #tpu.memory_space<vmem>>, vector<128x64xf32>
    %1 = arith.mulf %0, %0 : vector<128x64xf32>
    %cst = arith.constant dense<0.000000e+00> : vector<128xf32>
    %2 = vector.multi_reduction <add>, %1, %cst [1] : vector<128x64xf32> to vector<128xf32>
    %3 = vector.shape_cast %2 : vector<128xf32> to vector<128x1xf32>
    %4 = math.sqrt %3 : vector<128x1xf32>
    %cst_1 = arith.constant 9.99999996E-13 : f32
    %5 = vector.broadcast %cst_1 : f32 to vector<128x1xf32>
    %6 = arith.maximumf %4, %5 : vector<128x1xf32>
    %7 = vector.broadcast %6 : vector<128x1xf32> to vector<128x64xf32>
    %8 = arith.divf %0, %7 : vector<128x64xf32>
    %c0_2 = arith.constant 0 : index
    %c0_3 = arith.constant 0 : index
    %9 = vector.load %arg2[%c0_2, %c0_3] : memref<128x64xf32, #tpu.memory_space<vmem>>, vector<128x64xf32>
    tpu.vector_store %arg2[%c0_2, %c0_3], %8 {strides = array<i32>} : memref<128x64xf32, #tpu.memory_space<vmem>>, vector<128x64xf32>,
    return
  }
  func.func @transform_0(%arg0: i32) -> (i32, i32) {
    %c0_i32 = arith.constant 0 : i32
    %c0_i32_0 = arith.constant 0 : i32
    return %arg0, %c0_i32 : i32, i32
  }
  func.func @transform_1(%arg0: i32) -> (i32, i32) {
    %c0_i32 = arith.constant 0 : i32
    %c0_i32_0 = arith.constant 0 : i32
    return %arg0, %c0_i32 : i32, i32
  }
}

</mosaic_0001>

<llo_original>
// kernel: tpu_custom_call.1
$region0: #{tpu_custom_call.1}
  #allocation0 [shape = 'u32[]', space=smem, size = 0x4, offset = 0x4, fixed_abs, tag = 'smem constant byte address 0x4 - core index']
  #allocation1 [shape = 'u32[144,128]{1,0:T(1,128)}', space=vmem, size = 0x12000, scoped, tag = 'internal scratch']
  %s0 = inlined_call_operand.vmem [shape: f32[128,64], index: 0, kind: input, shape index: {}]
  %s1 = inlined_call_operand.vmem [shape: f32[128,64], index: 1, kind: output, shape index: {}]
  %s2 = sld [smem:[#allocation0]]
  $region14: #{tpu_custom_call.1} parent=0
    _
  %s4 = ssub.s32 1, %s2
  %s5 = scalar_select 0, %s4, %s2
  // Predicated region
  $region2: #{tpu_custom_call.1} parent=0 // pred_check
    _
  $region3: #{tpu_custom_call.1} parent=0 // pred_check_branch
    %7 = sbr.rel (0) target = $region5
  $region4: #{tpu_custom_call.1} parent=0 // pred_region
    _
  $region5: #{tpu_custom_call.1} parent=0 // pred_fallthru
    _
  %v8 = vld [vmem:[%s0] sm:$0xff]
  %v9 = vld [vmem:[%s0 + $0x8] sm:$0xff]
  %v10 = vld [vmem:[%s0 + $0x10] sm:$0xff]
  %v11 = vld [vmem:[%s0 + $0x18] sm:$0xff]
  %v12 = vld [vmem:[%s0 + $0x20] sm:$0xff]
  %v13 = vld [vmem:[%s0 + $0x28] sm:$0xff]
  %v14 = vld [vmem:[%s0 + $0x30] sm:$0xff]
  %v15 = vld [vmem:[%s0 + $0x38] sm:$0xff]
  %v16 = vld [vmem:[%s0 + $0x40] sm:$0xff]
  %v17 = vld [vmem:[%s0 + $0x48] sm:$0xff]
  %v18 = vld [vmem:[%s0 + $0x50] sm:$0xff]
  %v19 = vld [vmem:[%s0 + $0x58] sm:$0xff]
  %v20 = vld [vmem:[%s0 + $0x60] sm:$0xff]
  %v21 = vld [vmem:[%s0 + $0x68] sm:$0xff]
  %v22 = vld [vmem:[%s0 + $0x70] sm:$0xff]
  %v23 = vld [vmem:[%s0 + $0x78] sm:$0xff]
  %v24 = vmul.f32 %v8, %v8
  %v25 = vmul.f32 %v9, %v9
  %v26 = vmul.f32 %v10, %v10
  %v27 = vmul.f32 %v11, %v11
  %v28 = vmul.f32 %v12, %v12
  %v29 = vmul.f32 %v13, %v13
  %v30 = vmul.f32 %v14, %v14
  %v31 = vmul.f32 %v15, %v15
  %v32 = vmul.f32 %v16, %v16
  %v33 = vmul.f32 %v17, %v17
  %v34 = vmul.f32 %v18, %v18
  %v35 = vmul.f32 %v19, %v19
  %v36 = vmul.f32 %v20, %v20
  %v37 = vmul.f32 %v21, %v21
  %v38 = vmul.f32 %v22, %v22
  %v39 = vmul.f32 %v23, %v23
  %vm40 = vcmask 523264
  %v41 = vsel %vm40, %v24, 0.0
  %42 = vadd.xlane.f32.xlu0 %v41
  %v43 = vpop.xlane.xlu0 %42
  %v44 = vsel %vm40, %v25, 0.0
  %45 = vadd.xlane.f32.xlu0 %v44
  %v46 = vpop.xlane.xlu0 %45
  %v47 = vsel %vm40, %v26, 0.0
  %48 = vadd.xlane.f32.xlu0 %v47
  %v49 = vpop.xlane.xlu0 %48
  %v50 = vsel %vm40, %v27, 0.0
  %51 = vadd.xlane.f32.xlu0 %v50
  %v52 = vpop.xlane.xlu0 %51
  %v53 = vsel %vm40, %v28, 0.0
  %54 = vadd.xlane.f32.xlu0 %v53
  %v55 = vpop.xlane.xlu0 %54
  %v56 = vsel %vm40, %v29, 0.0
  %57 = vadd.xlane.f32.xlu0 %v56
  %v58 = vpop.xlane.xlu0 %57
  %v59 = vsel %vm40, %v30, 0.0
  %60 = vadd.xlane.f32.xlu0 %v59
  %v61 = vpop.xlane.xlu0 %60
  %v62 = vsel %vm40, %v31, 0.0
  %63 = vadd.xlane.f32.xlu0 %v62
  %v64 = vpop.xlane.xlu0 %63
  %v65 = vsel %vm40, %v32, 0.0
  %66 = vadd.xlane.f32.xlu0 %v65
  %v67 = vpop.xlane.xlu0 %66
  %v68 = vsel %vm40, %v33, 0.0
  %69 = vadd.xlane.f32.xlu0 %v68
  %v70 = vpop.xlane.xlu0 %69
  %v71 = vsel %vm40, %v34, 0.0
  %72 = vadd.xlane.f32.xlu0 %v71
  %v73 = vpop.xlane.xlu0 %72
  %v74 = vsel %vm40, %v35, 0.0
  %75 = vadd.xlane.f32.xlu0 %v74
  %v76 = vpop.xlane.xlu0 %75
  %v77 = vsel %vm40, %v36, 0.0
  %78 = vadd.xlane.f32.xlu0 %v77
  %v79 = vpop.xlane.xlu0 %78
  %v80 = vsel %vm40, %v37, 0.0
  %81 = vadd.xlane.f32.xlu0 %v80
  %v82 = vpop.xlane.xlu0 %81
  %v83 = vsel %vm40, %v38, 0.0
  %84 = vadd.xlane.f32.xlu0 %v83
  %v85 = vpop.xlane.xlu0 %84
  %v86 = vsel %vm40, %v39, 0.0
  %87 = vadd.xlane.f32.xlu0 %v86
  %v88 = vpop.xlane.xlu0 %87
  %v89 = vrsqrt.pop %v43
  %v90 = vmul.f32 %v43, %v89
  %vm91 = vcmp.eq.f32.partialorder %v43, inf
  %v92 = vsel %vm91, %v43, %v90
  %vm93 = vcmp.eq.f32.partialorder %v43, 0.0
  %v94 = vand.u32 %v43, 2147483648
  %v95 = vsel %vm93, %v94, %v92
  %v96 = vrsqrt.pop %v46
  %v97 = vmul.f32 %v46, %v96
  %vm98 = vcmp.eq.f32.partialorder %v46, inf
  %v99 = vsel %vm98, %v46, %v97
  %vm100 = vcmp.eq.f32.partialorder %v46, 0.0
  %v101 = vand.u32 %v46, 2147483648
  %v102 = vsel %vm100, %v101, %v99
  %v103 = vrsqrt.pop %v49
  %v104 = vmul.f32 %v49, %v103
  %vm105 = vcmp.eq.f32.partialorder %v49, inf
  %v106 = vsel %vm105, %v49, %v104
  %vm107 = vcmp.eq.f32.partialorder %v49, 0.0
  %v108 = vand.u32 %v49, 2147483648
  %v109 = vsel %vm107, %v108, %v106
  %v110 = vrsqrt.pop %v52
  %v111 = vmul.f32 %v52, %v110
  %vm112 = vcmp.eq.f32.partialorder %v52, inf
  %v113 = vsel %vm112, %v52, %v111
  %vm114 = vcmp.eq.f32.partialorder %v52, 0.0
  %v115 = vand.u32 %v52, 2147483648
  %v116 = vsel %vm114, %v115, %v113
  %v117 = vrsqrt.pop %v55
  %v118 = vmul.f32 %v55, %v117
  %vm119 = vcmp.eq.f32.partialorder %v55, inf
  %v120 = vsel %vm119, %v55, %v118
  %vm121 = vcmp.eq.f32.partialorder %v55, 0.0
  %v122 = vand.u32 %v55, 2147483648
  %v123 = vsel %vm121, %v122, %v120
  %v124 = vrsqrt.pop %v58
  %v125 = vmul.f32 %v58, %v124
  %vm126 = vcmp.eq.f32.partialorder %v58, inf
  %v127 = vsel %vm126, %v58, %v125
  %vm128 = vcmp.eq.f32.partialorder %v58, 0.0
  %v129 = vand.u32 %v58, 2147483648
  %v130 = vsel %vm128, %v129, %v127
  %v131 = vrsqrt.pop %v61
  %v132 = vmul.f32 %v61, %v131
  %vm133 = vcmp.eq.f32.partialorder %v61, inf
  %v134 = vsel %vm133, %v61, %v132
  %vm135 = vcmp.eq.f32.partialorder %v61, 0.0
  %v136 = vand.u32 %v61, 2147483648
  %v137 = vsel %vm135, %v136, %v134
  %v138 = vrsqrt.pop %v64
  %v139 = vmul.f32 %v64, %v138
  %vm140 = vcmp.eq.f32.partialorder %v64, inf
  %v141 = vsel %vm140, %v64, %v139
  %vm142 = vcmp.eq.f32.partialorder %v64, 0.0
  %v143 = vand.u32 %v64, 2147483648
  %v144 = vsel %vm142, %v143, %v141
  %v145 = vrsqrt.pop %v67
  %v146 = vmul.f32 %v67, %v145
  %vm147 = vcmp.eq.f32.partialorder %v67, inf
  %v148 = vsel %vm147, %v67, %v146
  %vm149 = vcmp.eq.f32.partialorder %v67, 0.0
  %v150 = vand.u32 %v67, 2147483648
  %v151 = vsel %vm149, %v150, %v148
  %v152 = vrsqrt.pop %v70
  %v153 = vmul.f32 %v70, %v152
  %vm154 = vcmp.eq.f32.partialorder %v70, inf
  %v155 = vsel %vm154, %v70, %v153
  %vm156 = vcmp.eq.f32.partialorder %v70, 0.0
  %v157 = vand.u32 %v70, 2147483648
  %v158 = vsel %vm156, %v157, %v155
  %v159 = vrsqrt.pop %v73
  %v160 = vmul.f32 %v73, %v159
  %vm161 = vcmp.eq.f32.partialorder %v73, inf
  %v162 = vsel %vm161, %v73, %v160
  %vm163 = vcmp.eq.f32.partialorder %v73, 0.0
  %v164 = vand.u32 %v73, 2147483648
  %v165 = vsel %vm163, %v164, %v162
  %v166 = vrsqrt.pop %v76
  %v167 = vmul.f32 %v76, %v166
  %vm168 = vcmp.eq.f32.partialorder %v76, inf
  %v169 = vsel %vm168, %v76, %v167
  %vm170 = vcmp.eq.f32.partialorder %v76, 0.0
  %v171 = vand.u32 %v76, 2147483648
  %v172 = vsel %vm170, %v171, %v169
  %v173 = vrsqrt.pop %v79
  %v174 = vmul.f32 %v79, %v173
  %vm175 = vcmp.eq.f32.partialorder %v79, inf
  %v176 = vsel %vm175, %v79, %v174
  %vm177 = vcmp.eq.f32.partialorder %v79, 0.0
  %v178 = vand.u32 %v79, 2147483648
  %v179 = vsel %vm177, %v178, %v176
  %v180 = vrsqrt.pop %v82
  %v181 = vmul.f32 %v82, %v180
  %vm182 = vcmp.eq.f32.partialorder %v82, inf
  %v183 = vsel %vm182, %v82, %v181
  %vm184 = vcmp.eq.f32.partialorder %v82, 0.0
  %v185 = vand.u32 %v82, 2147483648
  %v186 = vsel %vm184, %v185, %v183
  %v187 = vrsqrt.pop %v85
  %v188 = vmul.f32 %v85, %v187
  %vm189 = vcmp.eq.f32.partialorder %v85, inf
  %v190 = vsel %vm189, %v85, %v188
  %vm191 = vcmp.eq.f32.partialorder %v85, 0.0
  %v192 = vand.u32 %v85, 2147483648
  %v193 = vsel %vm191, %v192, %v190
  %v194 = vrsqrt.pop %v88
  %v195 = vmul.f32 %v88, %v194
  %vm196 = vcmp.eq.f32.partialorder %v88, inf
  %v197 = vsel %vm196, %v88, %v195
  %vm198 = vcmp.eq.f32.partialorder %v88, 0.0
  %v199 = vand.u32 %v88, 2147483648
  %v200 = vsel %vm198, %v199, %v197
  %v201 = vmax.f32 %v95, 1e-12
  %v202 = vmax.f32 %v102, 1e-12
  %v203 = vmax.f32 %v109, 1e-12
  %v204 = vmax.f32 %v116, 1e-12
  %v205 = vmax.f32 %v123, 1e-12
  %v206 = vmax.f32 %v130, 1e-12
  %v207 = vmax.f32 %v137, 1e-12
  %v208 = vmax.f32 %v144, 1e-12
  %v209 = vmax.f32 %v151, 1e-12
  %v210 = vmax.f32 %v158, 1e-12
  %v211 = vmax.f32 %v165, 1e-12
  %v212 = vmax.f32 %v172, 1e-12
  %v213 = vmax.f32 %v179, 1e-12
  %v214 = vmax.f32 %v186, 1e-12
  %v215 = vmax.f32 %v193, 1e-12
  %v216 = vmax.f32 %v200, 1e-12
  %v217 = vrcp.pop %v201
  %v218 = vmul.f32 %v8, %v217
  %v219 = vrcp.pop %v202
  %v220 = vmul.f32 %v9, %v219
  %v221 = vrcp.pop %v203
  %v222 = vmul.f32 %v10, %v221
  %v223 = vrcp.pop %v204
  %v224 = vmul.f32 %v11, %v223
  %v225 = vrcp.pop %v205
  %v226 = vmul.f32 %v12, %v225
  %v227 = vrcp.pop %v206
  %v228 = vmul.f32 %v13, %v227
  %v229 = vrcp.pop %v207
  %v230 = vmul.f32 %v14, %v229
  %v231 = vrcp.pop %v208
  %v232 = vmul.f32 %v15, %v231
  %v233 = vrcp.pop %v209
  %v234 = vmul.f32 %v16, %v233
  %v235 = vrcp.pop %v210
  %v236 = vmul.f32 %v17, %v235
  %v237 = vrcp.pop %v211
  %v238 = vmul.f32 %v18, %v237
  %v239 = vrcp.pop %v212
  %v240 = vmul.f32 %v19, %v239
  %v241 = vrcp.pop %v213
  %v242 = vmul.f32 %v20, %v241
  %v243 = vrcp.pop %v214
  %v244 = vmul.f32 %v21, %v243
  %v245 = vrcp.pop %v215
  %v246 = vmul.f32 %v22, %v245
  %v247 = vrcp.pop %v216
  %v248 = vmul.f32 %v23, %v247
  %249 = vst.msk [vmem:[%s1] sm:$0xff] %vm40, %v218
  %250 = vst.msk [vmem:[%s1 + $0x8] sm:$0xff] %vm40, %v220
  %251 = vst.msk [vmem:[%s1 + $0x10] sm:$0xff] %vm40, %v222
  %252 = vst.msk [vmem:[%s1 + $0x18] sm:$0xff] %vm40, %v224
  %253 = vst.msk [vmem:[%s1 + $0x20] sm:$0xff] %vm40, %v226
  %254 = vst.msk [vmem:[%s1 + $0x28] sm:$0xff] %vm40, %v228
  %255 = vst.msk [vmem:[%s1 + $0x30] sm:$0xff] %vm40, %v230
  %256 = vst.msk [vmem:[%s1 + $0x38] sm:$0xff] %vm40, %v232
  %257 = vst.msk [vmem:[%s1 + $0x40] sm:$0xff] %vm40, %v234
  %258 = vst.msk [vmem:[%s1 + $0x48] sm:$0xff] %vm40, %v236
  %259 = vst.msk [vmem:[%s1 + $0x50] sm:$0xff] %vm40, %v238
  %260 = vst.msk [vmem:[%s1 + $0x58] sm:$0xff] %vm40, %v240
  %261 = vst.msk [vmem:[%s1 + $0x60] sm:$0xff] %vm40, %v242
  %262 = vst.msk [vmem:[%s1 + $0x68] sm:$0xff] %vm40, %v244
  %263 = vst.msk [vmem:[%s1 + $0x70] sm:$0xff] %vm40, %v246
  %264 = vst.msk [vmem:[%s1 + $0x78] sm:$0xff] %vm40, %v248
  // Predicated region
  $region6: #{tpu_custom_call.1} parent=0 // pred_check
    _
  $region7: #{tpu_custom_call.1} parent=0 // pred_check_branch
    %266 = sbr.rel (0) target = $region9
  $region8: #{tpu_custom_call.1} parent=0 // pred_region
    _
  $region9: #{tpu_custom_call.1} parent=0 // pred_fallthru
    _
  // Predicated region
  $region10: #{tpu_custom_call.1} parent=0 // pred_check
    _
  $region11: #{tpu_custom_call.1} parent=0 // pred_check_branch
    %268 = sbr.rel (0) target = $region13
  $region12: #{tpu_custom_call.1} parent=0 // pred_region
    _
  $region13: #{tpu_custom_call.1} parent=0 // pred_fallthru
    _

</llo_original>
